<compile_context>
chip_gen: v7x
topology: tpu7x:2x2x1
jax: 0.10.0
libtpu: 0.0.40
codegen_flags: <defaults>
</compile_context>

<pallas_src>
import jax
import jax.numpy as jnp
from jax.experimental import pallas as pl
from jax.experimental.pallas import tpu as pltpu

NHEADS = 4
SHARPENING = 1.0   # must stay > 0 (applied before masking so -inf*0 cannot occur)


def mha_add_kernel(lens_ref, enc_ref, dec_ref, aw_in_ref,
                   w_enc_ref, b_enc_ref, w_dec_ref, v_ref,
                   w_out_ref, b_out_ref,
                   ctx_ref, aw_ref, cat_ref):
    Bb, T, E = enc_ref.shape
    A = w_enc_ref.shape[-1]
    D = dec_ref.shape[-1]
    H = NHEADS

    enc = enc_ref[...]                                            # [Bb, T, E] (f32 or bf16)

    # ---- additive attention energy (weights shared across heads -> one pass) ----
    enc_a = jnp.dot(enc.reshape(Bb * T, E), w_enc_ref[...],
                    preferred_element_type=jnp.float32)           # [Bb*T, A]
    dec_a = jnp.dot(dec_ref[...].reshape(Bb, D), w_dec_ref[...],
                    preferred_element_type=jnp.float32)
    dec_a = dec_a + b_enc_ref[...]                                # fold bias in once  [Bb, A]
    x = jnp.tanh(enc_a.reshape(Bb, T, A) + dec_a[:, None, :])     # [Bb, T, A]  (f32)

    # energy with T on the lane axis: [Bb, 1, T]
    v3 = jnp.broadcast_to(v_ref[...], (Bb, 1, A))
    energy = jnp.einsum('bxa,bta->bxt', v3, x,
                        preferred_element_type=jnp.float32)       # [Bb, 1, T]

    # ---- length mask + softmax along the lane (T) axis ----
    pos = jax.lax.broadcasted_iota(jnp.int32, (Bb, 1, T), 2)
    valid = pos < lens_ref[...]                                   # [Bb,1,1] -> [Bb,1,T]
    # NOTE: x_lens[b] == 0 would give all -inf -> NaN, same as the PyTorch module.
    e = jnp.where(valid, energy * SHARPENING, -jnp.inf)
    m = jnp.max(e, axis=-1, keepdims=True)
    p = jnp.exp(e - m)
    s = jnp.sum(p, axis=-1, keepdims=True)
    aw_ref[...] = p * pl.reciprocal(s, approx=True)               # [Bb, 1, T] (lane-dense)

    # ---- context uses the *input* attention weights (exactly as the PyTorch code) ----
    aw_in = aw_in_ref[...].astype(enc.dtype)                      # [Bb, H, T]
    ctx = jnp.einsum('bht,bte->bhe', aw_in, enc,
                     preferred_element_type=jnp.float32)          # [Bb, H, E]
    # Concatenate heads on the lane axis via a VMEM scratch so that W_out is a
    # single K = H*E matmul (avoids an unsupported sublane->lane value reshape).
    for h in range(H):
        cat_ref[:, :, h * E:(h + 1) * E] = ctx[:, h:h + 1, :]
    out = jnp.dot(cat_ref[...].reshape(Bb, H * E), w_out_ref[...],
                  preferred_element_type=jnp.float32) + b_out_ref[...]   # [Bb, E]
    ctx_ref[...] = out[:, None, :]                                       # [Bb, 1, E]


def _choose_block_b(B, T, E, itemsize, vmem_block_budget=4 * 1024 * 1024, max_bb=256):
    """Batch rows per grid step: largest divisor of B that keeps the enc block
    inside a conservative VMEM budget (v7x has only 64 MiB physical VMEM) while
    preferring >= 2 grid steps so v7x can spread the grid across both TCs."""
    cap = max(1, min(max_bb, vmem_block_budget // max(1, T * E * itemsize)))
    divisors = [d for d in range(1, B + 1) if B % d == 0 and d <= cap]
    multi_step = [d for d in divisors if B // d >= 2]
    return max(multi_step) if multi_step else max(divisors)


def multihead_attention_add(enc_out, x_lens, dec_out, aw_step, params,
                            *, enc_dtype=jnp.float32, block_b=None):
    """Forward pass of MultiheadAttentionMechanism (attn_type='add').

    enc_out [B,T,E], x_lens [B] int, dec_out [B,1,D], aw_step [nheads,B,T]
    -> (context [B,1,E] f32, new aw [nheads,B,T] f32)
    """
    B, T, E = enc_out.shape
    D = dec_out.shape[-1]
    A = params["w_encT"].shape[-1]
    H = NHEADS

    if block_b is None:
        block_b = _choose_block_b(B, T, E, jnp.dtype(enc_dtype).itemsize)
    assert B % block_b == 0
    num_blocks = B // block_b

    # enc_out dominates HBM traffic: optionally stream it (and the two matmuls
    # that consume it) in bf16 with f32 accumulation; tanh/softmax stay f32.
    enc_in = enc_out.astype(enc_dtype)
    w_enc_in = params["w_encT"].astype(enc_dtype)
    lens3 = x_lens.astype(jnp.int32).reshape(B, 1, 1)
    # [nheads,B,T] -> [B,nheads,T]: tiny tensor (nheads << E).  Batch-leading
    # layout lets the in-kernel contraction use the supported batched dot form.
    aw_in_bht = jnp.transpose(aw_step, (1, 0, 2))

    grid_spec = pltpu.PrefetchScalarGridSpec(
        num_scalar_prefetch=0,
        grid=(num_blocks,),
        in_specs=[
            pl.BlockSpec((block_b, 1, 1), lambda i: (i, 0, 0)),        # x_lens
            pl.BlockSpec((block_b, T, E), lambda i: (i, 0, 0)),        # enc_out
            pl.BlockSpec((block_b, 1, D), lambda i: (i, 0, 0)),        # dec_out
            pl.BlockSpec((block_b, H, T), lambda i: (i, 0, 0)),        # input aw
            pl.BlockSpec((E, A), lambda i: (0, 0)),                    # W_enc^T
            pl.BlockSpec((1, A), lambda i: (0, 0)),                    # b_enc
            pl.BlockSpec((D, A), lambda i: (0, 0)),                    # W_dec^T
            pl.BlockSpec((1, A), lambda i: (0, 0)),                    # v (row)
            pl.BlockSpec((H * E, E), lambda i: (0, 0)),                # W_out^T
            pl.BlockSpec((1, E), lambda i: (0, 0)),                    # b_out
        ],
        out_specs=(
            pl.BlockSpec((block_b, 1, E), lambda i: (i, 0, 0)),        # context
            pl.BlockSpec((block_b, 1, T), lambda i: (i, 0, 0)),        # new aw (one head)
        ),
        scratch_shapes=[pltpu.VMEM((block_b, 1, H * E), jnp.float32)],
    )

    ctx, aw_b1t = pl.pallas_call(
        mha_add_kernel,
        grid_spec=grid_spec,
        out_shape=(
            jax.ShapeDtypeStruct((B, 1, E), jnp.float32),
            jax.ShapeDtypeStruct((B, 1, T), jnp.float32),
        ),
        compiler_params=pltpu.CompilerParams(
            dimension_semantics=("parallel",)),
    )(lens3, enc_in, dec_out, aw_in_bht,
      w_enc_in, params["b_enc"][None, :], params["w_decT"],
      params["v_row"], params["w_outT"], params["b_out"][None, :])

    # All heads share one weight set -> identical new attention distributions.
    aw_new = jnp.broadcast_to(aw_b1t[:, 0, :][None], (H, B, T))
    return ctx, aw_new


def reference(enc_out, x_lens, dec_out, aw_step, params):
    """Pure-JAX reference matching the PyTorch forward (attn_type='add')."""
    B, T, E = enc_out.shape
    enc_a = enc_out @ params["w_encT"] + params["b_enc"]                 # [B,T,A]
    dec_a = dec_out @ params["w_decT"]                                   # [B,1,A]
    energy = jnp.einsum('bta,a->bt', jnp.tanh(enc_a + dec_a),
                        params["v_row"][0])                              # [B,T]
    mask = jnp.arange(T)[None, :] < x_lens[:, None]
    e = jnp.where(mask, energy, -jnp.inf) * SHARPENING
    aw_new = jax.nn.softmax(e, axis=-1)                                  # [B,T]
    aw_stack = jnp.broadcast_to(aw_new[None], (NHEADS, B, T))
    ctxs = jnp.einsum('hbt,bte->bhe', aw_step, enc_out)                  # [B,H,E]
    flat = ctxs.reshape(B, 1, NHEADS * E)
    out = flat @ params["w_outT"] + params["b_out"]                      # [B,1,E]
    return out, aw_stack


def init_params(key, E, D, A):
    ks = jax.random.split(key, 6)
    w_enc = jax.random.normal(ks[0], (A, E), jnp.float32) * 0.1   # Linear(E->A).weight
    b_enc = jax.random.normal(ks[1], (A,), jnp.float32) * 0.1
    w_dec = jax.random.normal(ks[2], (A, D), jnp.float32) * 0.1   # Linear(D->A, bias=False)
    v = jax.random.normal(ks[3], (1, A), jnp.float32) * 0.1       # Linear(A->1, bias=False)
    w_out = jax.random.normal(ks[4], (E, NHEADS * E), jnp.float32) * 0.1
    b_out = jax.random.normal(ks[5], (E,), jnp.float32) * 0.1
    return dict(w_encT=w_enc.T, b_enc=b_enc, w_decT=w_dec.T,
                v_row=v, w_outT=w_out.T, b_out=b_out)


def _run_case(key, B, T, E, D, A, x_lens):
    k1, k2, k3, kp = jax.random.split(key, 4)
    enc_out = jax.random.normal(k1, (B, T, E), jnp.float32)
    dec_out = jax.random.normal(k2, (B, 1, D), jnp.float32)
    aw_step = jax.nn.softmax(
        jax.random.normal(k3, (NHEADS, B, T), jnp.float32), axis=-1)
    params = init_params(kp, E, D, A)

    ctx_ref_, aw_ref_ = reference(enc_out, x_lens, dec_out, aw_step, params)

    # float32 enc stream: tight check.
    ctx, aw = multihead_attention_add(enc_out, x_lens, dec_out, aw_step, params,
                                      enc_dtype=jnp.float32)
    jax.block_until_ready((ctx, aw))
    assert ctx.shape == (B, 1, E) and aw.shape == (NHEADS, B, T)
    assert jnp.allclose(ctx, ctx_ref_, atol=2e-3, rtol=2e-3)
    assert jnp.allclose(aw, aw_ref_, atol=2e-3, rtol=2e-3)

    # bf16 enc stream (halves HBM traffic / doubles MXU rate): looser check.
    ctx_bf, aw_bf = multihead_attention_add(enc_out, x_lens, dec_out, aw_step, params,
                                            enc_dtype=jnp.bfloat16)
    jax.block_until_ready((ctx_bf, aw_bf))
    assert jnp.allclose(ctx_bf, ctx_ref_, atol=2e-2, rtol=2e-2)
    assert jnp.allclose(aw_bf, aw_ref_, atol=2e-2, rtol=2e-2)


if __name__ == "__main__":
    key = jax.random.PRNGKey(0)
    k_a, k_b, k_len = jax.random.split(key, 3)

    # Small config matching the module docstring shapes.
    _run_case(k_a, B=2, T=16, E=32, D=32, A=32,
              x_lens=jnp.array([16, 12], dtype=jnp.int32))

    # Larger batch: exercises the coarsened path (block_b=8, two parallel grid steps).
    x_lens2 = jax.random.randint(k_len, (16,), 1, 33, dtype=jnp.int32)
    _run_case(k_b, B=16, T=32, E=32, D=32, A=32, x_lens=x_lens2)

    print("KERNEL_OK")
</pallas_src>

<mosaic_0001>
module attributes {stable_mosaic.version = 11 : i64} {
  func.func @mha_add_kernel(%arg0: i32, %arg1: memref<1x1x1xi32, #tpu.memory_space<vmem>>, %arg2: memref<1x16x32xf32, #tpu.memory_space<vmem>>, %arg3: memref<1x1x32xf32, #tpu.memory_space<vmem>>, %arg4: memref<1x4x16xf32, #tpu.memory_space<vmem>>, %arg5: memref<32x32xf32, #tpu.memory_space<vmem>>, %arg6: memref<1x32xf32, #tpu.memory_space<vmem>>, %arg7: memref<32x32xf32, #tpu.memory_space<vmem>>, %arg8: memref<1x32xf32, #tpu.memory_space<vmem>>, %arg9: memref<128x32xf32, #tpu.memory_space<vmem>>, %arg10: memref<1x32xf32, #tpu.memory_space<vmem>>, %arg11: memref<1x1x32xf32, #tpu.memory_space<vmem>>, %arg12: memref<1x1x16xf32, #tpu.memory_space<vmem>>, %arg13: memref<1x1x128xf32, #tpu.memory_space<vmem>>) attributes {dimension_semantics = [#tpu.dimension_semantics<parallel>], iteration_bounds = array<i64: 2>, scalar_prefetch = 0 : i64, scratch_operands = 1 : i64, tpu.core_type = #tpu.core_type<tc>, window_params = [{transform_indices = @transform_0, window_bounds = array<i64: 1, 1, 1>}, {transform_indices = @transform_1, window_bounds = array<i64: 1, 16, 32>}, {transform_indices = @transform_2, window_bounds = array<i64: 1, 1, 32>}, {transform_indices = @transform_3, window_bounds = array<i64: 1, 4, 16>}, {pipeline_mode = #tpu.pipeline_mode<synchronous>, transform_indices = @transform_4, window_bounds = array<i64: 32, 32>}, {pipeline_mode = #tpu.pipeline_mode<synchronous>, transform_indices = @transform_5, window_bounds = array<i64: 1, 32>}, {pipeline_mode = #tpu.pipeline_mode<synchronous>, transform_indices = @transform_6, window_bounds = array<i64: 32, 32>}, {pipeline_mode = #tpu.pipeline_mode<synchronous>, transform_indices = @transform_7, window_bounds = array<i64: 1, 32>}, {pipeline_mode = #tpu.pipeline_mode<synchronous>, transform_indices = @transform_8, window_bounds = array<i64: 128, 32>}, {pipeline_mode = #tpu.pipeline_mode<synchronous>, transform_indices = @transform_9, window_bounds = array<i64: 1, 32>}, {transform_indices = @transform_10, window_bounds = array<i64: 1, 1, 32>}, {transform_indices = @transform_11, window_bounds = array<i64: 1, 1, 16>}]} {
    %c0 = arith.constant 0 : index
    %c0_0 = arith.constant 0 : index
    %c0_1 = arith.constant 0 : index
    %0 = vector.load %arg2[%c0, %c0_0, %c0_1] : memref<1x16x32xf32, #tpu.memory_space<vmem>>, vector<1x16x32xf32>
    %1 = vector.shape_cast %0 : vector<1x16x32xf32> to vector<16x32xf32>
    %c0_2 = arith.constant 0 : index
    %c0_3 = arith.constant 0 : index
    %2 = vector.load %arg5[%c0_2, %c0_3] : memref<32x32xf32, #tpu.memory_space<vmem>>, vector<32x32xf32>
    %cst = arith.constant dense<0.000000e+00> : vector<16x32xf32>
    %3 = tpu.matmul %1, %2, %cst {dimension_numbers = #tpu.dot_dimension_numbers<[1], [0], [0], [1], [0, 0, 1, 1], [], []>} : vector<16x32xf32>, vector<32x32xf32>, vector<16x32xf32> -> vector<16x32xf32>
    %c0_4 = arith.constant 0 : index
    %c0_5 = arith.constant 0 : index
    %c0_6 = arith.constant 0 : index
    %4 = vector.load %arg3[%c0_4, %c0_5, %c0_6] : memref<1x1x32xf32, #tpu.memory_space<vmem>>, vector<1x1x32xf32>
    %5 = vector.shape_cast %4 : vector<1x1x32xf32> to vector<1x32xf32>
    %c0_7 = arith.constant 0 : index
    %c0_8 = arith.constant 0 : index
    %6 = vector.load %arg7[%c0_7, %c0_8] : memref<32x32xf32, #tpu.memory_space<vmem>>, vector<32x32xf32>
    %cst_9 = arith.constant dense<0.000000e+00> : vector<1x32xf32>
    %7 = tpu.matmul %5, %6, %cst_9 {dimension_numbers = #tpu.dot_dimension_numbers<[1], [0], [0], [1], [0, 0, 1, 1], [], []>} : vector<1x32xf32>, vector<32x32xf32>, vector<1x32xf32> -> vector<1x32xf32>
    %c0_10 = arith.constant 0 : index
    %c0_11 = arith.constant 0 : index
    %8 = vector.load %arg6[%c0_10, %c0_11] : memref<1x32xf32, #tpu.memory_space<vmem>>, vector<1x32xf32>
    %9 = arith.addf %7, %8 : vector<1x32xf32>
    %10 = vector.shape_cast %3 : vector<16x32xf32> to vector<1x16x32xf32>
    %11 = vector.shape_cast %9 : vector<1x32xf32> to vector<1x1x32xf32>
    %12 = vector.broadcast %11 : vector<1x1x32xf32> to vector<1x16x32xf32>
    %13 = arith.addf %10, %12 : vector<1x16x32xf32>
    %14 = math.tanh %13 : vector<1x16x32xf32>
    %c0_12 = arith.constant 0 : index
    %c0_13 = arith.constant 0 : index
    %15 = vector.load %arg8[%c0_12, %c0_13] : memref<1x32xf32, #tpu.memory_space<vmem>>, vector<1x32xf32>
    %16 = vector.shape_cast %15 : vector<1x32xf32> to vector<1x1x32xf32>
    "tpu.trace_start"() <{level = 10 : i32, message = "bxa,bta->bxt"}> : () -> ()
    %cst_14 = arith.constant dense<0.000000e+00> : vector<1x1x16xf32>
    %17 = tpu.matmul %16, %14, %cst_14 {dimension_numbers = #tpu.dot_dimension_numbers<[2], [2], [1], [1], [0, 0, 0, 1, 1, 1], [0], [0]>} : vector<1x1x32xf32>, vector<1x16x32xf32>, vector<1x1x16xf32> -> vector<1x1x16xf32>
    "tpu.trace_stop"() : () -> ()
    %18 = tpu.iota {dimensions = array<i32: 2>} : vector<1x1x16xi32>
    %c0_15 = arith.constant 0 : index
    %c0_16 = arith.constant 0 : index
    %c0_17 = arith.constant 0 : index
    %19 = vector.load %arg1[%c0_15, %c0_16, %c0_17] : memref<1x1x1xi32, #tpu.memory_space<vmem>>, vector<1x1x1xi32>
    %20 = vector.broadcast %19 : vector<1x1x1xi32> to vector<1x1x16xi32>
    %21 = arith.cmpi slt, %18, %20 : vector<1x1x16xi32>
    %cst_18 = arith.constant 1.000000e+00 : f32
    %22 = vector.broadcast %cst_18 : f32 to vector<1x1x16xf32>
    %23 = arith.mulf %17, %22 : vector<1x1x16xf32>
    %cst_19 = arith.constant 0xFF800000 : f32
    %24 = vector.broadcast %cst_19 : f32 to vector<1x1x16xf32>
    %25 = arith.select %21, %23, %24 : vector<1x1x16xi1>, vector<1x1x16xf32>
    %cst_20 = arith.constant dense<0xFF800000> : vector<1x1xf32>
    %26 = vector.multi_reduction <maximumf>, %25, %cst_20 [2] : vector<1x1x16xf32> to vector<1x1xf32>
    %27 = vector.shape_cast %26 : vector<1x1xf32> to vector<1x1x1xf32>
    %28 = vector.broadcast %27 : vector<1x1x1xf32> to vector<1x1x16xf32>
    %29 = arith.subf %25, %28 : vector<1x1x16xf32>
    %30 = math.exp %29 : vector<1x1x16xf32>
    %cst_21 = arith.constant dense<0.000000e+00> : vector<1x1xf32>
    %31 = vector.multi_reduction <add>, %30, %cst_21 [2] : vector<1x1x16xf32> to vector<1x1xf32>
    %32 = vector.shape_cast %31 : vector<1x1xf32> to vector<1x1x1xf32>
    %33 = tpu.reciprocal %32 {approx = true} : vector<1x1x1xf32> -> vector<1x1x1xf32>
    %34 = vector.broadcast %33 : vector<1x1x1xf32> to vector<1x1x16xf32>
    %35 = arith.mulf %30, %34 : vector<1x1x16xf32>
    %c0_22 = arith.constant 0 : index
    %c0_23 = arith.constant 0 : index
    %c0_24 = arith.constant 0 : index
    %36 = vector.load %arg12[%c0_22, %c0_23, %c0_24] : memref<1x1x16xf32, #tpu.memory_space<vmem>>, vector<1x1x16xf32>
    tpu.vector_store %arg12[%c0_22, %c0_23, %c0_24], %35 {strides = array<i32>} : memref<1x1x16xf32, #tpu.memory_space<vmem>>, vector<1x1x16xf32>,
    %c0_25 = arith.constant 0 : index
    %c0_26 = arith.constant 0 : index
    %c0_27 = arith.constant 0 : index
    %37 = vector.load %arg4[%c0_25, %c0_26, %c0_27] : memref<1x4x16xf32, #tpu.memory_space<vmem>>, vector<1x4x16xf32>
    "tpu.trace_start"() <{level = 10 : i32, message = "bht,bte->bhe"}> : () -> ()
    %cst_28 = arith.constant dense<0.000000e+00> : vector<1x4x32xf32>
    %38 = tpu.matmul %37, %0, %cst_28 {dimension_numbers = #tpu.dot_dimension_numbers<[2], [1], [1], [2], [0, 0, 0, 1, 1, 2], [0], [0]>} : vector<1x4x16xf32>, vector<1x16x32xf32>, vector<1x4x32xf32> -> vector<1x4x32xf32>
    "tpu.trace_stop"() : () -> ()
    %39 = vector.extract_strided_slice %38 {offsets = [0, 0, 0], sizes = [1, 1, 32], strides = [1, 1, 1]} : vector<1x4x32xf32> to vector<1x1x32xf32>
    %c0_29 = arith.constant 0 : index
    %c0_30 = arith.constant 0 : index
    %c0_31 = arith.constant 0 : index
    %40 = vector.load %arg13[%c0_29, %c0_30, %c0_31] : memref<1x1x128xf32, #tpu.memory_space<vmem>>, vector<1x1x32xf32>
    tpu.vector_store %arg13[%c0_29, %c0_30, %c0_31], %39 {strides = array<i32>} : memref<1x1x128xf32, #tpu.memory_space<vmem>>, vector<1x1x32xf32>,
    %41 = vector.extract_strided_slice %38 {offsets = [0, 1, 0], sizes = [1, 1, 32], strides = [1, 1, 1]} : vector<1x4x32xf32> to vector<1x1x32xf32>
    %c0_32 = arith.constant 0 : index
    %c0_33 = arith.constant 0 : index
    %c32 = arith.constant 32 : index
    %42 = vector.load %arg13[%c0_32, %c0_33, %c32] : memref<1x1x128xf32, #tpu.memory_space<vmem>>, vector<1x1x32xf32>
    tpu.vector_store %arg13[%c0_32, %c0_33, %c32], %41 {strides = array<i32>} : memref<1x1x128xf32, #tpu.memory_space<vmem>>, vector<1x1x32xf32>,
    %43 = vector.extract_strided_slice %38 {offsets = [0, 2, 0], sizes = [1, 1, 32], strides = [1, 1, 1]} : vector<1x4x32xf32> to vector<1x1x32xf32>
    %c0_34 = arith.constant 0 : index
    %c0_35 = arith.constant 0 : index
    %c64 = arith.constant 64 : index
    %44 = vector.load %arg13[%c0_34, %c0_35, %c64] : memref<1x1x128xf32, #tpu.memory_space<vmem>>, vector<1x1x32xf32>
    tpu.vector_store %arg13[%c0_34, %c0_35, %c64], %43 {strides = array<i32>} : memref<1x1x128xf32, #tpu.memory_space<vmem>>, vector<1x1x32xf32>,
    %45 = vector.extract_strided_slice %38 {offsets = [0, 3, 0], sizes = [1, 1, 32], strides = [1, 1, 1]} : vector<1x4x32xf32> to vector<1x1x32xf32>
    %c0_36 = arith.constant 0 : index
    %c0_37 = arith.constant 0 : index
    %c96 = arith.constant 96 : index
    %46 = vector.load %arg13[%c0_36, %c0_37, %c96] : memref<1x1x128xf32, #tpu.memory_space<vmem>>, vector<1x1x32xf32>
    tpu.vector_store %arg13[%c0_36, %c0_37, %c96], %45 {strides = array<i32>} : memref<1x1x128xf32, #tpu.memory_space<vmem>>, vector<1x1x32xf32>,
    %c0_38 = arith.constant 0 : index
    %c0_39 = arith.constant 0 : index
    %c0_40 = arith.constant 0 : index
    %47 = vector.load %arg13[%c0_38, %c0_39, %c0_40] : memref<1x1x128xf32, #tpu.memory_space<vmem>>, vector<1x1x128xf32>
    %48 = vector.shape_cast %47 : vector<1x1x128xf32> to vector<1x128xf32>
    %c0_41 = arith.constant 0 : index
    %c0_42 = arith.constant 0 : index
    %49 = vector.load %arg9[%c0_41, %c0_42] : memref<128x32xf32, #tpu.memory_space<vmem>>, vector<128x32xf32>
    %cst_43 = arith.constant dense<0.000000e+00> : vector<1x32xf32>
    %50 = tpu.matmul %48, %49, %cst_43 {dimension_numbers = #tpu.dot_dimension_numbers<[1], [0], [0], [1], [0, 0, 1, 1], [], []>} : vector<1x128xf32>, vector<128x32xf32>, vector<1x32xf32> -> vector<1x32xf32>
    %c0_44 = arith.constant 0 : index
    %c0_45 = arith.constant 0 : index
    %51 = vector.load %arg10[%c0_44, %c0_45] : memref<1x32xf32, #tpu.memory_space<vmem>>, vector<1x32xf32>
    %52 = arith.addf %50, %51 : vector<1x32xf32>
    %53 = vector.shape_cast %52 : vector<1x32xf32> to vector<1x1x32xf32>
    %c0_46 = arith.constant 0 : index
    %c0_47 = arith.constant 0 : index
    %c0_48 = arith.constant 0 : index
    %54 = vector.load %arg11[%c0_46, %c0_47, %c0_48] : memref<1x1x32xf32, #tpu.memory_space<vmem>>, vector<1x1x32xf32>
    tpu.vector_store %arg11[%c0_46, %c0_47, %c0_48], %53 {strides = array<i32>} : memref<1x1x32xf32, #tpu.memory_space<vmem>>, vector<1x1x32xf32>,
    return
  }
  func.func @transform_0(%arg0: i32) -> (i32, i32, i32) {
    %c0_i32 = arith.constant 0 : i32
    %c0_i32_0 = arith.constant 0 : i32
    %c0_i32_1 = arith.constant 0 : i32
    return %arg0, %c0_i32, %c0_i32_0 : i32, i32, i32
  }
  func.func @transform_1(%arg0: i32) -> (i32, i32, i32) {
    %c0_i32 = arith.constant 0 : i32
    %c0_i32_0 = arith.constant 0 : i32
    %c0_i32_1 = arith.constant 0 : i32
    return %arg0, %c0_i32, %c0_i32_0 : i32, i32, i32
  }
  func.func @transform_2(%arg0: i32) -> (i32, i32, i32) {
    %c0_i32 = arith.constant 0 : i32
    %c0_i32_0 = arith.constant 0 : i32
    %c0_i32_1 = arith.constant 0 : i32
    return %arg0, %c0_i32, %c0_i32_0 : i32, i32, i32
  }
  func.func @transform_3(%arg0: i32) -> (i32, i32, i32) {
    %c0_i32 = arith.constant 0 : i32
    %c0_i32_0 = arith.constant 0 : i32
    %c0_i32_1 = arith.constant 0 : i32
    return %arg0, %c0_i32, %c0_i32_0 : i32, i32, i32
  }
  func.func @transform_4(%arg0: i32) -> (i32, i32) {
    %c0_i32 = arith.constant 0 : i32
    %c0_i32_0 = arith.constant 0 : i32
    %c0_i32_1 = arith.constant 0 : i32
    return %c0_i32, %c0_i32_0 : i32, i32
  }
  func.func @transform_5(%arg0: i32) -> (i32, i32) {
    %c0_i32 = arith.constant 0 : i32
    %c0_i32_0 = arith.constant 0 : i32
    %c0_i32_1 = arith.constant 0 : i32
    return %c0_i32, %c0_i32_0 : i32, i32
  }
  func.func @transform_6(%arg0: i32) -> (i32, i32) {
    %c0_i32 = arith.constant 0 : i32
    %c0_i32_0 = arith.constant 0 : i32
    %c0_i32_1 = arith.constant 0 : i32
    return %c0_i32, %c0_i32_0 : i32, i32
  }
  func.func @transform_7(%arg0: i32) -> (i32, i32) {
    %c0_i32 = arith.constant 0 : i32
    %c0_i32_0 = arith.constant 0 : i32
    %c0_i32_1 = arith.constant 0 : i32
    return %c0_i32, %c0_i32_0 : i32, i32
  }
  func.func @transform_8(%arg0: i32) -> (i32, i32) {
    %c0_i32 = arith.constant 0 : i32
    %c0_i32_0 = arith.constant 0 : i32
    %c0_i32_1 = arith.constant 0 : i32
    return %c0_i32, %c0_i32_0 : i32, i32
  }
  func.func @transform_9(%arg0: i32) -> (i32, i32) {
    %c0_i32 = arith.constant 0 : i32
    %c0_i32_0 = arith.constant 0 : i32
    %c0_i32_1 = arith.constant 0 : i32
    return %c0_i32, %c0_i32_0 : i32, i32
  }
  func.func @transform_10(%arg0: i32) -> (i32, i32, i32) {
    %c0_i32 = arith.constant 0 : i32
    %c0_i32_0 = arith.constant 0 : i32
    %c0_i32_1 = arith.constant 0 : i32
    return %arg0, %c0_i32, %c0_i32_0 : i32, i32, i32
  }
  func.func @transform_11(%arg0: i32) -> (i32, i32, i32) {
    %c0_i32 = arith.constant 0 : i32
    %c0_i32_0 = arith.constant 0 : i32
    %c0_i32_1 = arith.constant 0 : i32
    return %arg0, %c0_i32, %c0_i32_0 : i32, i32, i32
  }
}

</mosaic_0001>

<llo_original>
// kernel: tpu_custom_call.1
$region0: #{tpu_custom_call.1}
  #allocation0 [shape = 'u32[]', space=smem, size = 0x4, offset = 0x4, fixed_abs, tag = 'smem constant byte address 0x4 - core index']
  #allocation1 [shape = 'u32[144,128]{1,0:T(1,128)}', space=vmem, size = 0x12000, scoped, tag = 'internal scratch']
  #allocation2 [shape = 'f32[1,1,128]{2,1,0:T(1,128)}', space=vmem, size = 0x200, scoped, tag = 'scratch operand']
  %s0 = inlined_call_operand.vmem [shape: s32[2,1,1], index: 0, kind: input, shape index: {}]
  %s1 = inlined_call_operand.vmem [shape: f32[2,16,32], index: 1, kind: input, shape index: {}]
  %s2 = inlined_call_operand.vmem [shape: f32[2,1,32], index: 2, kind: input, shape index: {}]
  %s3 = inlined_call_operand.vmem [shape: f32[2,4,16], index: 3, kind: input, shape index: {}]
  %s4 = inlined_call_operand.vmem [shape: f32[32,32], index: 4, kind: input, shape index: {}]
  %s5 = inlined_call_operand.vmem [shape: f32[1,32], index: 5, kind: input, shape index: {}]
  %s6 = inlined_call_operand.vmem [shape: f32[32,32], index: 6, kind: input, shape index: {}]
  %s7 = inlined_call_operand.vmem [shape: f32[1,32], index: 7, kind: input, shape index: {}]
  %s8 = inlined_call_operand.vmem [shape: f32[128,32], index: 8, kind: input, shape index: {}]
  %s9 = inlined_call_operand.vmem [shape: f32[1,32], index: 9, kind: input, shape index: {}]
  %s10 = inlined_call_operand.hbm [shape: f32[2,1,32], index: 10, kind: output, shape index: {0}]
  %s11 = inlined_call_operand.hbm [shape: f32[2,1,16], index: 11, kind: output, shape index: {1}]
  %12 = xla_tuple %s10, %s11
  %s13 = sld [smem:[#allocation0]]
  $region81: #{tpu_custom_call.1} parent=0
    _
  %s15 = ssub.s32 1, %s13
  %s16 = scalar_select 0, %s15, %s13
  $region1: #{tpu_custom_call.1} parent=0
    #allocation3 [shape = 'u8[1024]{0}', space=vmem, size = 0x400, scoped, tag = 'output window, operand 0']
    #allocation4 [shape = 's32[2]{0}', space=sflag, size = 0x8, scoped, tag = 'scoped memory for tpu_custom_call.1']
    #allocation5 [shape = 'u8[1024]{0}', space=vmem, size = 0x400, scoped, tag = 'output window, operand 1']
    #allocation6 [shape = 's32[2]{0}', space=sflag, size = 0x8, scoped, tag = 'scoped memory for tpu_custom_call.1']
    %17 = vsyncpa [#allocation4], 0
    %s18 = scalar_lea.sflag [#allocation4], 1
    %19 = vsyncpa %s18, 0
    %20 = vsyncpa [#allocation6], 0
    %s21 = scalar_lea.sflag [#allocation6], 1
    %22 = vsyncpa %s21, 0
    loop: start=0, step=1, limit=4
    $region2: #{tpu_custom_call.1} parent=1 // loop_pre_header
      _
    $region3: #{tpu_custom_call.1} parent=1 // loop_header
      %s24 = sphi 0, %s28
      %p25 = scmp.ge.s32.totalorder %s24, 4
      %s34 = sphi 0, %s36
      %s37 = sphi 0, %s34
      %s38 = sphi 0, %s37
      %s54 = sphi 0, %s38
      %s60 = sphi 0, %s62
      %s63 = sphi 0, %s60
      %s64 = sphi 0, %s63
      %s80 = sphi 0, %s64
      %s86 = sphi 0, %s88
      %s89 = sphi 0, %s86
      %s90 = sphi 0, %s89
      %s106 = sphi 0, %s90
      %s112 = sphi 0, %s114
      %s115 = sphi 0, %s112
      %s116 = sphi 0, %s115
      %s132 = sphi 0, %s116
      %s136 = sphi 0, %s136
      %s138 = sphi 0, %s136
      %s139 = sphi 0, %s138
      %s153 = sphi 0, %s139
      %s157 = sphi 0, %s157
      %s159 = sphi 0, %s157
      %s160 = sphi 0, %s159
      %s174 = sphi 0, %s160
      %s178 = sphi 0, %s178
      %s180 = sphi 0, %s178
      %s181 = sphi 0, %s180
      %s195 = sphi 0, %s181
      %s199 = sphi 0, %s199
      %s201 = sphi 0, %s199
      %s202 = sphi 0, %s201
      %s216 = sphi 0, %s202
      %s220 = sphi 0, %s220
      %s222 = sphi 0, %s220
      %s223 = sphi 0, %s222
      %s237 = sphi 0, %s223
      %s241 = sphi 0, %s241
      %s243 = sphi 0, %s241
      %s244 = sphi 0, %s243
      %s258 = sphi 0, %s244
      %s264 = sphi 0, %s266
      %s267 = sphi 0, %s264
      %s268 = sphi 0, %s267
      %s284 = sphi 0, %s268
      %s290 = sphi 0, %s292
      %s293 = sphi 0, %s290
      %s294 = sphi 0, %s293
      %s310 = sphi 0, %s294
    $region4: #{tpu_custom_call.1} parent=1 // loop_header_branch
      %27 = sbr.rel (%p25) target = $region8
    $region5: #{tpu_custom_call.1} parent=1 // loop_body
      %s29 = ssub.s32 %s24, 1
      %s30 = ssub.s32 %s24, 2
      %s31 = sadd.s32 %s24, 1
      %s32 = ssub.s32 %s24, %s31
      %p33 = scmp.eq.s32.totalorder %s32, 0
      %s35 = sadd.s32 %s34, 1
      %s36 = scalar_select %p33, %s34, %s35
      %p39 = pneg %p33
      %p40 = scmp.eq.s32.totalorder %s24, 1
      %p41 = por %p39, %p40
      %p42 = scmp.ne.s32.totalorder %s34, %s37
      %p43 = scmp.eq.s32.totalorder %s24, 0
      %p44 = por %p42, %p43
      %p45 = scmp.ne.s32.totalorder %s34, %s37
      %p46 = scmp.eq.s32.totalorder %s29, 1
      %p47 = por %p45, %p46
      %p48 = scmp.ne.s32.totalorder %s37, %s38
      %p49 = scmp.eq.s32.totalorder %s29, 0
      %p50 = por %p48, %p49
      %p51 = scmp.ne.s32.totalorder %s37, %s38
      %p52 = scmp.eq.s32.totalorder %s30, 1
      %p53 = por %p51, %p52
      %p55 = scmp.ne.s32.totalorder %s38, %s54
      %p56 = scmp.eq.s32.totalorder %s30, 0
      %p57 = por %p55, %p56
      %s58 = ssub.s32 %s24, %s31
      %p59 = scmp.eq.s32.totalorder %s58, 0
      %s61 = sadd.s32 %s60, 1
      %s62 = scalar_select %p59, %s60, %s61
      %p65 = pneg %p59
      %p66 = scmp.eq.s32.totalorder %s24, 1
      %p67 = por %p65, %p66
      %p68 = scmp.ne.s32.totalorder %s60, %s63
      %p69 = scmp.eq.s32.totalorder %s24, 0
      %p70 = por %p68, %p69
      %p71 = scmp.ne.s32.totalorder %s60, %s63
      %p72 = scmp.eq.s32.totalorder %s29, 1
      %p73 = por %p71, %p72
      %p74 = scmp.ne.s32.totalorder %s63, %s64
      %p75 = scmp.eq.s32.totalorder %s29, 0
      %p76 = por %p74, %p75
      %p77 = scmp.ne.s32.totalorder %s63, %s64
      %p78 = scmp.eq.s32.totalorder %s30, 1
      %p79 = por %p77, %p78
      %p81 = scmp.ne.s32.totalorder %s64, %s80
      %p82 = scmp.eq.s32.totalorder %s30, 0
      %p83 = por %p81, %p82
      %s84 = ssub.s32 %s24, %s31
      %p85 = scmp.eq.s32.totalorder %s84, 0
      %s87 = sadd.s32 %s86, 1
      %s88 = scalar_select %p85, %s86, %s87
      %p91 = pneg %p85
      %p92 = scmp.eq.s32.totalorder %s24, 1
      %p93 = por %p91, %p92
      %p94 = scmp.ne.s32.totalorder %s86, %s89
      %p95 = scmp.eq.s32.totalorder %s24, 0
      %p96 = por %p94, %p95
      %p97 = scmp.ne.s32.totalorder %s86, %s89
      %p98 = scmp.eq.s32.totalorder %s29, 1
      %p99 = por %p97, %p98
      %p100 = scmp.ne.s32.totalorder %s89, %s90
      %p101 = scmp.eq.s32.totalorder %s29, 0
      %p102 = por %p100, %p101
      %p103 = scmp.ne.s32.totalorder %s89, %s90
      %p104 = scmp.eq.s32.totalorder %s30, 1
      %p105 = por %p103, %p104
      %p107 = scmp.ne.s32.totalorder %s90, %s106
      %p108 = scmp.eq.s32.totalorder %s30, 0
      %p109 = por %p107, %p108
      %s110 = ssub.s32 %s24, %s31
      %p111 = scmp.eq.s32.totalorder %s110, 0
      %s113 = sadd.s32 %s112, 1
      %s114 = scalar_select %p111, %s112, %s113
      %p117 = pneg %p111
      %p118 = scmp.eq.s32.totalorder %s24, 1
      %p119 = por %p117, %p118
      %p120 = scmp.ne.s32.totalorder %s112, %s115
      %p121 = scmp.eq.s32.totalorder %s24, 0
      %p122 = por %p120, %p121
      %p123 = scmp.ne.s32.totalorder %s112, %s115
      %p124 = scmp.eq.s32.totalorder %s29, 1
      %p125 = por %p123, %p124
      %p126 = scmp.ne.s32.totalorder %s115, %s116
      %p127 = scmp.eq.s32.totalorder %s29, 0
      %p128 = por %p126, %p127
      %p129 = scmp.ne.s32.totalorder %s115, %s116
      %p130 = scmp.eq.s32.totalorder %s30, 1
      %p131 = por %p129, %p130
      %p133 = scmp.ne.s32.totalorder %s116, %s132
      %p134 = scmp.eq.s32.totalorder %s30, 0
      %p135 = por %p133, %p134
      %s137 = sadd.s32 %s136, 1
      %p140 = scmp.eq.s32.totalorder %s24, 1
      %p141 = scmp.ne.s32.totalorder %s136, %s138
      %p142 = scmp.eq.s32.totalorder %s24, 0
      %p143 = por %p141, %p142
      %p144 = scmp.ne.s32.totalorder %s136, %s138
      %p145 = scmp.eq.s32.totalorder %s29, 1
      %p146 = por %p144, %p145
      %p147 = scmp.ne.s32.totalorder %s138, %s139
      %p148 = scmp.eq.s32.totalorder %s29, 0
      %p149 = por %p147, %p148
      %p150 = scmp.ne.s32.totalorder %s138, %s139
      %p151 = scmp.eq.s32.totalorder %s30, 1
      %p152 = por %p150, %p151
      %p154 = scmp.ne.s32.totalorder %s139, %s153
      %p155 = scmp.eq.s32.totalorder %s30, 0
      %p156 = por %p154, %p155
      %s158 = sadd.s32 %s157, 1
      %p161 = scmp.eq.s32.totalorder %s24, 1
      %p162 = scmp.ne.s32.totalorder %s157, %s159
      %p163 = scmp.eq.s32.totalorder %s24, 0
      %p164 = por %p162, %p163
      %p165 = scmp.ne.s32.totalorder %s157, %s159
      %p166 = scmp.eq.s32.totalorder %s29, 1
      %p167 = por %p165, %p166
      %p168 = scmp.ne.s32.totalorder %s159, %s160
      %p169 = scmp.eq.s32.totalorder %s29, 0
      %p170 = por %p168, %p169
      %p171 = scmp.ne.s32.totalorder %s159, %s160
      %p172 = scmp.eq.s32.totalorder %s30, 1
      %p173 = por %p171, %p172
      %p175 = scmp.ne.s32.totalorder %s160, %s174
      %p176 = scmp.eq.s32.totalorder %s30, 0
      %p177 = por %p175, %p176
      %s179 = sadd.s32 %s178, 1
      %p182 = scmp.eq.s32.totalorder %s24, 1
      %p183 = scmp.ne.s32.totalorder %s178, %s180
      %p184 = scmp.eq.s32.totalorder %s24, 0
      %p185 = por %p183, %p184
      %p186 = scmp.ne.s32.totalorder %s178, %s180
      %p187 = scmp.eq.s32.totalorder %s29, 1
      %p188 = por %p186, %p187
      %p189 = scmp.ne.s32.totalorder %s180, %s181
      %p190 = scmp.eq.s32.totalorder %s29, 0
      %p191 = por %p189, %p190
      %p192 = scmp.ne.s32.totalorder %s180, %s181
      %p193 = scmp.eq.s32.totalorder %s30, 1
      %p194 = por %p192, %p193
      %p196 = scmp.ne.s32.totalorder %s181, %s195
      %p197 = scmp.eq.s32.totalorder %s30, 0
      %p198 = por %p196, %p197
      %s200 = sadd.s32 %s199, 1
      %p203 = scmp.eq.s32.totalorder %s24, 1
      %p204 = scmp.ne.s32.totalorder %s199, %s201
      %p205 = scmp.eq.s32.totalorder %s24, 0
      %p206 = por %p204, %p205
      %p207 = scmp.ne.s32.totalorder %s199, %s201
      %p208 = scmp.eq.s32.totalorder %s29, 1
      %p209 = por %p207, %p208
      %p210 = scmp.ne.s32.totalorder %s201, %s202
      %p211 = scmp.eq.s32.totalorder %s29, 0
      %p212 = por %p210, %p211
      %p213 = scmp.ne.s32.totalorder %s201, %s202
      %p214 = scmp.eq.s32.totalorder %s30, 1
      %p215 = por %p213, %p214
      %p217 = scmp.ne.s32.totalorder %s202, %s216
      %p218 = scmp.eq.s32.totalorder %s30, 0
      %p219 = por %p217, %p218
      %s221 = sadd.s32 %s220, 1
      %p224 = scmp.eq.s32.totalorder %s24, 1
      %p225 = scmp.ne.s32.totalorder %s220, %s222
      %p226 = scmp.eq.s32.totalorder %s24, 0
      %p227 = por %p225, %p226
      %p228 = scmp.ne.s32.totalorder %s220, %s222
      %p229 = scmp.eq.s32.totalorder %s29, 1
      %p230 = por %p228, %p229
      %p231 = scmp.ne.s32.totalorder %s222, %s223
      %p232 = scmp.eq.s32.totalorder %s29, 0
      %p233 = por %p231, %p232
      %p234 = scmp.ne.s32.totalorder %s222, %s223
      %p235 = scmp.eq.s32.totalorder %s30, 1
      %p236 = por %p234, %p235
      %p238 = scmp.ne.s32.totalorder %s223, %s237
      %p239 = scmp.eq.s32.totalorder %s30, 0
      %p240 = por %p238, %p239
      %s242 = sadd.s32 %s241, 1
      %p245 = scmp.eq.s32.totalorder %s24, 1
      %p246 = scmp.ne.s32.totalorder %s241, %s243
      %p247 = scmp.eq.s32.totalorder %s24, 0
      %p248 = por %p246, %p247
      %p249 = scmp.ne.s32.totalorder %s241, %s243
      %p250 = scmp.eq.s32.totalorder %s29, 1
      %p251 = por %p249, %p250
      %p252 = scmp.ne.s32.totalorder %s243, %s244
      %p253 = scmp.eq.s32.totalorder %s29, 0
      %p254 = por %p252, %p253
      %p255 = scmp.ne.s32.totalorder %s243, %s244
      %p256 = scmp.eq.s32.totalorder %s30, 1
      %p257 = por %p255, %p256
      %p259 = scmp.ne.s32.totalorder %s244, %s258
      %p260 = scmp.eq.s32.totalorder %s30, 0
      %p261 = por %p259, %p260
      %s262 = ssub.s32 %s24, %s31
      %p263 = scmp.eq.s32.totalorder %s262, 0
      %s265 = sadd.s32 %s264, 1
      %s266 = scalar_select %p263, %s264, %s265
      %p269 = pneg %p263
      %p270 = scmp.eq.s32.totalorder %s24, 1
      %p271 = por %p269, %p270
      %p272 = scmp.ne.s32.totalorder %s264, %s267
      %p273 = scmp.eq.s32.totalorder %s24, 0
      %p274 = por %p272, %p273
      %p275 = scmp.ne.s32.totalorder %s264, %s267
      %p276 = scmp.eq.s32.totalorder %s29, 1
      %p277 = por %p275, %p276
      %p278 = scmp.ne.s32.totalorder %s267, %s268
      %p279 = scmp.eq.s32.totalorder %s29, 0
      %p280 = por %p278, %p279
      %p281 = scmp.ne.s32.totalorder %s267, %s268
      %p282 = scmp.eq.s32.totalorder %s30, 1
      %p283 = por %p281, %p282
      %p285 = scmp.ne.s32.totalorder %s268, %s284
      %p286 = scmp.eq.s32.totalorder %s30, 0
      %p287 = por %p285, %p286
      %s288 = ssub.s32 %s24, %s31
      %p289 = scmp.eq.s32.totalorder %s288, 0
      %s291 = sadd.s32 %s290, 1
      %s292 = scalar_select %p289, %s290, %s291
      %p295 = pneg %p289
      %p296 = scmp.eq.s32.totalorder %s24, 1
      %p297 = por %p295, %p296
      %p298 = scmp.ne.s32.totalorder %s290, %s293
      %p299 = scmp.eq.s32.totalorder %s24, 0
      %p300 = por %p298, %p299
      %p301 = scmp.ne.s32.totalorder %s290, %s293
      %p302 = scmp.eq.s32.totalorder %s29, 1
      %p303 = por %p301, %p302
      %p304 = scmp.ne.s32.totalorder %s293, %s294
      %p305 = scmp.eq.s32.totalorder %s29, 0
      %p306 = por %p304, %p305
      %p307 = scmp.ne.s32.totalorder %s293, %s294
      %p308 = scmp.eq.s32.totalorder %s30, 1
      %p309 = por %p307, %p308
      %p311 = scmp.ne.s32.totalorder %s294, %s310
      %p312 = scmp.eq.s32.totalorder %s30, 0
      %p313 = por %p311, %p312
      %p314 = scmp.le.s32.totalorder 1, %s24
      %p315 = scmp.lt.s32.totalorder %s24, 3
      %p316 = pnand %p314, %p315
      %p317 = pneg %p316
      // Predicated region
      $region9: #{tpu_custom_call.1} parent=5 // pred_check
        _
      $region10: #{tpu_custom_call.1} parent=5 // pred_check_branch
        %319 = sbr.rel (%p316) target = $region12
      $region11: #{tpu_custom_call.1} parent=5 // pred_region
        %s320 = ssub.s32 %s24, 1
        // Predicated region
        $region13: #{tpu_custom_call.1} parent=11 // pred_check
          %p321 = pneg %p149
        $region14: #{tpu_custom_call.1} parent=11 // pred_check_branch
          %323 = sbr.rel (%p321) target = $region16
        $region15: #{tpu_custom_call.1} parent=11 // pred_region
          _
        $region16: #{tpu_custom_call.1} parent=11 // pred_fallthru
          _
        // Predicated region
        $region17: #{tpu_custom_call.1} parent=11 // pred_check
          %p324 = pneg %p170
        $region18: #{tpu_custom_call.1} parent=11 // pred_check_branch
          %326 = sbr.rel (%p324) target = $region20
        $region19: #{tpu_custom_call.1} parent=11 // pred_region
          _
        $region20: #{tpu_custom_call.1} parent=11 // pred_fallthru
          _
        // Predicated region
        $region21: #{tpu_custom_call.1} parent=11 // pred_check
          %p327 = pneg %p191
        $region22: #{tpu_custom_call.1} parent=11 // pred_check_branch
          %329 = sbr.rel (%p327) target = $region24
        $region23: #{tpu_custom_call.1} parent=11 // pred_region
          _
        $region24: #{tpu_custom_call.1} parent=11 // pred_fallthru
          _
        // Predicated region
        $region25: #{tpu_custom_call.1} parent=11 // pred_check
          %p330 = pneg %p212
        $region26: #{tpu_custom_call.1} parent=11 // pred_check_branch
          %332 = sbr.rel (%p330) target = $region28
        $region27: #{tpu_custom_call.1} parent=11 // pred_region
          _
        $region28: #{tpu_custom_call.1} parent=11 // pred_fallthru
          _
        // Predicated region
        $region29: #{tpu_custom_call.1} parent=11 // pred_check
          %p333 = pneg %p233
        $region30: #{tpu_custom_call.1} parent=11 // pred_check_branch
          %335 = sbr.rel (%p333) target = $region32
        $region31: #{tpu_custom_call.1} parent=11 // pred_region
          _
        $region32: #{tpu_custom_call.1} parent=11 // pred_fallthru
          _
        // Predicated region
        $region33: #{tpu_custom_call.1} parent=11 // pred_check
          %p336 = pneg %p254
        $region34: #{tpu_custom_call.1} parent=11 // pred_check_branch
          %338 = sbr.rel (%p336) target = $region36
        $region35: #{tpu_custom_call.1} parent=11 // pred_region
          _
        $region36: #{tpu_custom_call.1} parent=11 // pred_fallthru
          _
      $region12: #{tpu_custom_call.1} parent=5 // pred_fallthru
        _
      %p339 = scmp.lt.s32.totalorder %s24, 2
      // Predicated region
      $region37: #{tpu_custom_call.1} parent=5 // pred_check
        %p340 = pneg %p339
      $region38: #{tpu_custom_call.1} parent=5 // pred_check_branch
        %342 = sbr.rel (%p340) target = $region40
      $region39: #{tpu_custom_call.1} parent=5 // pred_region
        // Predicated region
        $region41: #{tpu_custom_call.1} parent=39 // pred_check
          %p343 = pneg %p44
        $region42: #{tpu_custom_call.1} parent=39 // pred_check_branch
          %345 = sbr.rel (%p343) target = $region44
        $region43: #{tpu_custom_call.1} parent=39 // pred_region
          %p346 = scmp.lt.s32.totalorder %s24, 1
          %s347 = scalar_select %p346, %s24, 1
          %s348 = scalar_lea.vmem %s0, %s347
        $region44: #{tpu_custom_call.1} parent=39 // pred_fallthru
          _
        // Predicated region
        $region45: #{tpu_custom_call.1} parent=39 // pred_check
          %p349 = pneg %p70
        $region46: #{tpu_custom_call.1} parent=39 // pred_check_branch
          %351 = sbr.rel (%p349) target = $region48
        $region47: #{tpu_custom_call.1} parent=39 // pred_region
          %p352 = scmp.lt.s32.totalorder %s24, 1
          %s353 = scalar_select %p352, %s24, 1
          %s354 = smul.addr %s353, 2
          %s355 = smul.addr %s354, 8
          %s356 = scalar_lea.vmem %s1, %s355
        $region48: #{tpu_custom_call.1} parent=39 // pred_fallthru
          _
        // Predicated region
        $region49: #{tpu_custom_call.1} parent=39 // pred_check
          %p357 = pneg %p96
        $region50: #{tpu_custom_call.1} parent=39 // pred_check_branch
          %359 = sbr.rel (%p357) target = $region52
        $region51: #{tpu_custom_call.1} parent=39 // pred_region
          %p360 = scmp.lt.s32.totalorder %s24, 1
          %s361 = scalar_select %p360, %s24, 1
          %s362 = scalar_lea.vmem %s2, %s361
        $region52: #{tpu_custom_call.1} parent=39 // pred_fallthru
          _
        // Predicated region
        $region53: #{tpu_custom_call.1} parent=39 // pred_check
          %p363 = pneg %p122
        $region54: #{tpu_custom_call.1} parent=39 // pred_check_branch
          %365 = sbr.rel (%p363) target = $region56
        $region55: #{tpu_custom_call.1} parent=39 // pred_region
          %p366 = scmp.lt.s32.totalorder %s24, 1
          %s367 = scalar_select %p366, %s24, 1
          %s368 = smul.addr %s367, 4
          %s369 = scalar_lea.vmem %s3, %s368
        $region56: #{tpu_custom_call.1} parent=39 // pred_fallthru
          _
      $region40: #{tpu_custom_call.1} parent=5 // pred_fallthru
        _
      %p370 = scmp.le.s32.totalorder 1, %s24
      %p371 = scmp.lt.s32.totalorder %s24, 3
      %p372 = pnand %p370, %p371
      %p373 = pneg %p372
      // Predicated region
      $region57: #{tpu_custom_call.1} parent=5 // pred_check
        _
      $region58: #{tpu_custom_call.1} parent=5 // pred_check_branch
        %375 = sbr.rel (%p372) target = $region60
      $region59: #{tpu_custom_call.1} parent=5 // pred_region
        %s376 = ssub.s32 %s24, 1
        %p377 = scmp.lt.s32.totalorder %s29, 1
        %s378 = scalar_select %p377, %s29, 1
        %s379 = scalar_lea.vmem %s0, %s378
        %p380 = pneg %p50
        %p381 = pneg %p47
        %p382 = scmp.lt.s32.totalorder %s29, 1
        %s383 = scalar_select %p382, %s29, 1
        %s384 = smul.addr %s383, 2
        %s385 = smul.addr %s384, 8
        %s386 = scalar_lea.vmem %s1, %s385
        %p387 = pneg %p76
        %p388 = pneg %p73
        %p389 = scmp.lt.s32.totalorder %s29, 1
        %s390 = scalar_select %p389, %s29, 1
        %s391 = scalar_lea.vmem %s2, %s390
        %p392 = pneg %p102
        %p393 = pneg %p99
        %p394 = scmp.lt.s32.totalorder %s29, 1
        %s395 = scalar_select %p394, %s29, 1
        %s396 = smul.addr %s395, 4
        %s397 = scalar_lea.vmem %s3, %s396
        %p398 = pneg %p128
        %p399 = pneg %p125
        %p400 = pneg %p149
        %p401 = pneg %p146
        %p402 = pneg %p170
        %p403 = pneg %p167
        %p404 = pneg %p191
        %p405 = pneg %p188
        %p406 = pneg %p212
        %p407 = pneg %p209
        %p408 = pneg %p233
        %p409 = pneg %p230
        %p410 = pneg %p254
        %p411 = pneg %p251
        %p412 = pneg %p280
        %p413 = pneg %p277
        %s414 = sand.u32 %s267, 1
        %s415 = scalar_lea.sflag [#allocation4], %s414
        %s416 = sand.u32 %s267, 1
        %s417 = scalar_lea.vmem [#allocation3], %s416
        %p418 = pneg %p306
        %p419 = pneg %p303
        %s420 = sand.u32 %s293, 1
        %s421 = scalar_lea.sflag [#allocation6], %s420
        %s422 = sand.u32 %s293, 1
        %s423 = scalar_lea.vmem [#allocation5], %s422
        %p424 = scmp.lt.s32.totalorder %s29, 1
        %s425 = scalar_select %p424, %s29, 1
        %s426 = scalar_lea.vmem %s0, %s425
        %p427 = scmp.lt.s32.totalorder %s29, 1
        %s428 = scalar_select %p427, %s29, 1
        %s429 = smul.addr %s428, 2
        %s430 = smul.addr %s429, 8
        %s431 = scalar_lea.vmem %s1, %s430
        %p432 = scmp.lt.s32.totalorder %s29, 1
        %s433 = scalar_select %p432, %s29, 1
        %s434 = scalar_lea.vmem %s2, %s433
        %p435 = scmp.lt.s32.totalorder %s29, 1
        %s436 = scalar_select %p435, %s29, 1
        %s437 = smul.addr %s436, 4
        %s438 = scalar_lea.vmem %s3, %s437
        %v439 = vld [vmem:[%s431] sm:$0xff]
        %v440 = vld [vmem:[%s431 + $0x8] sm:$0xff]
        %v441 = vld [vmem:[%s4] sm:$0xff]
        %v442 = vld [vmem:[%s4 + $0x8] sm:$0xff]
        %v443 = vld [vmem:[%s4 + $0x10] sm:$0xff]
        %v444 = vld [vmem:[%s4 + $0x18] sm:$0xff]
        %vm445 = vcmask 261120
        %v447 = vsel %vm445, %v439, 0
        %v450 = vsel %vm445, %v440, 0
        %452 = vmatprep.subr.mxu0 0.0
        %453 = vmatpush1.msra.mxu0 %v441
        %454 = vmatprep.subr.mxu0 0.0
        %455 = vmatpush1.msra.mxu0 %v442
        %456 = vmatprep.subr.mxu0 0.0
        %457 = vmatpush1.msra.mxu0 %v443
        %458 = vmatprep.subr.mxu0 0.0
        %459 = vmatpush1.msra.mxu0 %v444
        %460 = vmatprep.subr.mxu0 0.0
        %461 = vmatpush1.msra.mxu0 0.0
        %462 = vmatprep.subr.mxu0 0.0
        %463 = vmatpush1.msra.mxu0 0.0
        %464 = vmatprep.subr.mxu0 0.0
        %465 = vmatpush1.msra.mxu0 0.0
        %466 = vmatprep.subr.mxu0 0.0
        %467 = vmatpush1.msra.mxu0 0.0
        %468 = vmatprep.subr.mxu0 0.0
        %469 = vmatpush1.msra.mxu0 0.0
        %470 = vmatprep.subr.mxu0 0.0
        %471 = vmatpush1.msra.mxu0 0.0
        %472 = vmatprep.subr.mxu0 0.0
        %473 = vmatpush1.msra.mxu0 0.0
        %474 = vmatprep.subr.mxu0 0.0
        %475 = vmatpush1.msra.mxu0 0.0
        %476 = vmatprep.subr.mxu0 0.0
        %477 = vmatpush1.msra.mxu0 0.0
        %478 = vmatprep.subr.mxu0 0.0
        %479 = vmatpush1.msra.mxu0 0.0
        %480 = vmatprep.subr.mxu0 0.0
        %481 = vmatpush1.msra.mxu0 0.0
        %482 = vmatprep.subr.mxu0 0.0
        %483 = vmatpush1.msra.mxu0 0.0
        %484 = vmatprep.subr.mxu0 0.0
        %485 = vmatpush1.msra.mxu0 0.0
        %486 = vmatprep.subr.mxu0 0.0
        %487 = vmatpush1.msra.mxu0 0.0
        %488 = vmatprep.subr.mxu0 0.0
        %489 = vmatpush1.msra.mxu0 0.0
        %490 = vmatprep.subr.mxu0 0.0
        %491 = vmatpush1.msra.mxu0 0.0
        %492 = vmatprep.subr.mxu0 0.0
        %493 = vmatpush1.msra.mxu0 0.0
        %494 = vmatprep.subr.mxu0 0.0
        %495 = vmatpush1.msra.mxu0 0.0
        %496 = vmatprep.subr.mxu0 0.0
        %497 = vmatpush1.msra.mxu0 0.0
        %498 = vmatprep.subr.mxu0 0.0
        %499 = vmatpush1.msra.mxu0 0.0
        %500 = vmatprep.subr.mxu0 0.0
        %501 = vmatpush1.msra.mxu0 0.0
        %502 = vmatprep.subr.mxu0 0.0
        %503 = vmatpush1.msra.mxu0 0.0
        %504 = vmatprep.subr.mxu0 0.0
        %505 = vmatpush1.msra.mxu0 0.0
        %506 = vmatprep.subr.mxu0 0.0
        %507 = vmatpush1.msra.mxu0 0.0
        %508 = vmatprep.subr.mxu0 0.0
        %509 = vmatpush1.msra.mxu0 0.0
        %510 = vmatprep.subr.mxu0 0.0
        %511 = vmatpush1.msra.mxu0 0.0
        %512 = vmatprep.subr.mxu0 0.0
        %513 = vmatpush1.msra.mxu0 0.0
        %514 = vmatprep.subr.mxu0 0.0
        %515 = vmatpush1.msra.mxu0 0.0
        %516 = vmatprep.mubr.f32.mxu0 0.0
        %517 = vmatmul.mubr.f32.gmra.mrb[0].mxu0 %v447
        %v518 = vpop.f32.mrb[0].mxu0
        %v519 = vadd.f32 0.0, %v518
        %v520 = vpop.f32.mrb[0].mxu0
        %521 = vmatprep.mubr.f32.mxu0 0.0
        %522 = vmatmul.mubr.f32.gmra.mrb[0].mxu0 %v450
        %v523 = vpop.f32.mrb[0].mxu0
        %v524 = vadd.f32 0.0, %v523
        %v525 = vpop.f32.mrb[0].mxu0
        %526 = vdwg.mxu0
        %v527 = vld [vmem:[%s434] sm:$0x1]
        %v528 = vld [vmem:[%s6] sm:$0xff]
        %v529 = vld [vmem:[%s6 + $0x8] sm:$0xff]
        %v530 = vld [vmem:[%s6 + $0x10] sm:$0xff]
        %v531 = vld [vmem:[%s6 + $0x18] sm:$0xff]
        %v532 = vld [vmem:[%s5] sm:$0x1]
        %v534 = vsel %vm445, %v527, 0
        %536 = vmatprep.subr.mxu0 0.0
        %537 = vmatpush1.msra.mxu0 %v528
        %538 = vmatprep.subr.mxu0 0.0
        %539 = vmatpush1.msra.mxu0 %v529
        %540 = vmatprep.subr.mxu0 0.0
        %541 = vmatpush1.msra.mxu0 %v530
        %542 = vmatprep.subr.mxu0 0.0
        %543 = vmatpush1.msra.mxu0 %v531
        %544 = vmatprep.subr.mxu0 0.0
        %545 = vmatpush1.msra.mxu0 0.0
        %546 = vmatprep.subr.mxu0 0.0
        %547 = vmatpush1.msra.mxu0 0.0
        %548 = vmatprep.subr.mxu0 0.0
        %549 = vmatpush1.msra.mxu0 0.0
        %550 = vmatprep.subr.mxu0 0.0
        %551 = vmatpush1.msra.mxu0 0.0
        %552 = vmatprep.subr.mxu0 0.0
        %553 = vmatpush1.msra.mxu0 0.0
        %554 = vmatprep.subr.mxu0 0.0
        %555 = vmatpush1.msra.mxu0 0.0
        %556 = vmatprep.subr.mxu0 0.0
        %557 = vmatpush1.msra.mxu0 0.0
        %558 = vmatprep.subr.mxu0 0.0
        %559 = vmatpush1.msra.mxu0 0.0
        %560 = vmatprep.subr.mxu0 0.0
        %561 = vmatpush1.msra.mxu0 0.0
        %562 = vmatprep.subr.mxu0 0.0
        %563 = vmatpush1.msra.mxu0 0.0
        %564 = vmatprep.subr.mxu0 0.0
        %565 = vmatpush1.msra.mxu0 0.0
        %566 = vmatprep.subr.mxu0 0.0
        %567 = vmatpush1.msra.mxu0 0.0
        %568 = vmatprep.subr.mxu0 0.0
        %569 = vmatpush1.msra.mxu0 0.0
        %570 = vmatprep.subr.mxu0 0.0
        %571 = vmatpush1.msra.mxu0 0.0
        %572 = vmatprep.subr.mxu0 0.0
        %573 = vmatpush1.msra.mxu0 0.0
        %574 = vmatprep.subr.mxu0 0.0
        %575 = vmatpush1.msra.mxu0 0.0
        %576 = vmatprep.subr.mxu0 0.0
        %577 = vmatpush1.msra.mxu0 0.0
        %578 = vmatprep.subr.mxu0 0.0
        %579 = vmatpush1.msra.mxu0 0.0
        %580 = vmatprep.subr.mxu0 0.0
        %581 = vmatpush1.msra.mxu0 0.0
        %582 = vmatprep.subr.mxu0 0.0
        %583 = vmatpush1.msra.mxu0 0.0
        %584 = vmatprep.subr.mxu0 0.0
        %585 = vmatpush1.msra.mxu0 0.0
        %586 = vmatprep.subr.mxu0 0.0
        %587 = vmatpush1.msra.mxu0 0.0
        %588 = vmatprep.subr.mxu0 0.0
        %589 = vmatpush1.msra.mxu0 0.0
        %590 = vmatprep.subr.mxu0 0.0
        %591 = vmatpush1.msra.mxu0 0.0
        %592 = vmatprep.subr.mxu0 0.0
        %593 = vmatpush1.msra.mxu0 0.0
        %594 = vmatprep.subr.mxu0 0.0
        %595 = vmatpush1.msra.mxu0 0.0
        %596 = vmatprep.subr.mxu0 0.0
        %597 = vmatpush1.msra.mxu0 0.0
        %598 = vmatprep.subr.mxu0 0.0
        %599 = vmatpush1.msra.mxu0 0.0
        %600 = vmatprep.mubr.f32.mxu0 0.0
        %601 = vmatmul.mubr.f32.gmra.mrb[0].mxu0 %v534
        %v602 = vpop.f32.mrb[0].mxu0
        %v603 = vadd.f32 %v532, %v602
        %v604 = vpop.f32.mrb[0].mxu0
        %605 = vdwg.mxu0
        %v606 = vlaneseq
        %v607 = vshrl.u32 %v606, 7
        %v608 = vsub.s32 0, %v607
        %v609 = vrot.slane %v603, %v608
        %v610 = vadd.f32 %v519, %v609
        %v611 = vadd.f32 %v524, %v609
        %v612 = vtanh.pop %v610
        %v613 = vtanh.pop %v611
        %v614 = vld [vmem:[%s7] sm:$0x1]
        %v616 = vsel %vm445, %v614, 0
        %v619 = vsel %vm445, %v612, 0
        %v622 = vsel %vm445, %v613, 0
        %624 = vmatprep.subr.mxu0 0.0
        %625 = vmatpush1.xpose.msra.mxu0 %v619
        %626 = vmatprep.subr.mxu0 0.0
        %627 = vmatpush1.xpose.msra.mxu0 %v622
        %628 = vmatprep.subr.mxu0 0.0
        %629 = vmatpush1.xpose.msra.mxu0 0.0
        %630 = vmatprep.subr.mxu0 0.0
        %631 = vmatpush1.xpose.msra.mxu0 0.0
        %632 = vmatprep.subr.mxu0 0.0
        %633 = vmatpush1.xpose.msra.mxu0 0.0
        %634 = vmatprep.subr.mxu0 0.0
        %635 = vmatpush1.xpose.msra.mxu0 0.0
        %636 = vmatprep.subr.mxu0 0.0
        %637 = vmatpush1.xpose.msra.mxu0 0.0
        %638 = vmatprep.subr.mxu0 0.0
        %639 = vmatpush1.xpose.msra.mxu0 0.0
        %640 = vmatprep.subr.mxu0 0.0
        %641 = vmatpush1.xpose.msra.mxu0 0.0
        %642 = vmatprep.subr.mxu0 0.0
        %643 = vmatpush1.xpose.msra.mxu0 0.0
        %644 = vmatprep.subr.mxu0 0.0
        %645 = vmatpush1.xpose.msra.mxu0 0.0
        %646 = vmatprep.subr.mxu0 0.0
        %647 = vmatpush1.xpose.msra.mxu0 0.0
        %648 = vmatprep.subr.mxu0 0.0
        %649 = vmatpush1.xpose.msra.mxu0 0.0
        %650 = vmatprep.subr.mxu0 0.0
        %651 = vmatpush1.xpose.msra.mxu0 0.0
        %652 = vmatprep.subr.mxu0 0.0
        %653 = vmatpush1.xpose.msra.mxu0 0.0
        %654 = vmatprep.subr.mxu0 0.0
        %655 = vmatpush1.xpose.msra.mxu0 0.0
        %656 = vmatprep.subr.mxu0 0.0
        %657 = vmatpush1.xpose.msra.mxu0 0.0
        %658 = vmatprep.subr.mxu0 0.0
        %659 = vmatpush1.xpose.msra.mxu0 0.0
        %660 = vmatprep.subr.mxu0 0.0
        %661 = vmatpush1.xpose.msra.mxu0 0.0
        %662 = vmatprep.subr.mxu0 0.0
        %663 = vmatpush1.xpose.msra.mxu0 0.0
        %664 = vmatprep.subr.mxu0 0.0
        %665 = vmatpush1.xpose.msra.mxu0 0.0
        %666 = vmatprep.subr.mxu0 0.0
        %667 = vmatpush1.xpose.msra.mxu0 0.0
        %668 = vmatprep.subr.mxu0 0.0
        %669 = vmatpush1.xpose.msra.mxu0 0.0
        %670 = vmatprep.subr.mxu0 0.0
        %671 = vmatpush1.xpose.msra.mxu0 0.0
        %672 = vmatprep.subr.mxu0 0.0
        %673 = vmatpush1.xpose.msra.mxu0 0.0
        %674 = vmatprep.subr.mxu0 0.0
        %675 = vmatpush1.xpose.msra.mxu0 0.0
        %676 = vmatprep.subr.mxu0 0.0
        %677 = vmatpush1.xpose.msra.mxu0 0.0
        %678 = vmatprep.subr.mxu0 0.0
        %679 = vmatpush1.xpose.msra.mxu0 0.0
        %680 = vmatprep.subr.mxu0 0.0
        %681 = vmatpush1.xpose.msra.mxu0 0.0
        %682 = vmatprep.subr.mxu0 0.0
        %683 = vmatpush1.xpose.msra.mxu0 0.0
        %684 = vmatprep.subr.mxu0 0.0
        %685 = vmatpush1.xpose.msra.mxu0 0.0
        %686 = vmatprep.subr.mxu0 0.0
        %687 = vmatpush1.xpose.msra.mxu0 0.0
        %688 = vmatprep.mubr.f32.mxu0 0.0
        %689 = vmatmul.mubr.f32.gmra.mrb[0].mxu0 %v616
        %v690 = vpop.f32.mrb[0].mxu0
        %v691 = vadd.f32 0.0, %v690
        %v692 = vpop.f32.mrb[0].mxu0
        %693 = vdwg.mxu0
        %v694 = vlaneseq
        %v695 = vand.u32 %v694, 127
        %v696 = vld [vmem:[%s426] sm:$0x1]
        %697 = vset.pattern.permute.xlu0 0
        %698 = vperm.xlu0 %697, %v696
        %v699 = vpop.permute.xlu0 %698
        %v700 = vlaneseq
        %v701 = vshrl.u32 %v700, 7
        %v702 = vsub.s32 0, %v701
        %v703 = vrot.slane %v699, %v702
        %vm704 = vcmp.lt.s32.totalorder %v695, %v703
        %v705 = vsel %vm704, %v691, -inf
        %vm706 = vcmask 122880
        %v707 = vsel %vm706, %v705, -inf
        %708 = vmax.xlane.f32.xlu0 %v707
        %v709 = vpop.xlane.xlu0 %708
        %v710 = vsub.f32 %v705, %v709
        %v711 = vmul.f32 %v710, 1.442695
        %v712 = vpow.pop %v711
        %v713 = vsel %vm706, %v712, 0.0
        %714 = vadd.xlane.f32.xlu0 %v713
        %v715 = vpop.xlane.xlu0 %714
        %v716 = vrcp.pop %v715
        %v717 = vmul.f32 %v712, %v716
        %718 = vst.msk [vmem:[%s423] sm:$0x1] %vm706, %v717
        %v719 = vld [vmem:[%s438] sm:$0xf]
        %vm720 = vcmask 130048
        %v722 = vsel %vm720, %v719, 0
        %724 = vmatprep.subr.mxu0 0.0
        %725 = vmatpush1.msra.mxu0 %v439
        %726 = vmatprep.subr.mxu0 0.0
        %727 = vmatpush1.msra.mxu0 %v440
        %728 = vmatprep.subr.mxu0 0.0
        %729 = vmatpush1.msra.mxu0 0.0
        %730 = vmatprep.subr.mxu0 0.0
        %731 = vmatpush1.msra.mxu0 0.0
        %732 = vmatprep.subr.mxu0 0.0
        %733 = vmatpush1.msra.mxu0 0.0
        %734 = vmatprep.subr.mxu0 0.0
        %735 = vmatpush1.msra.mxu0 0.0
        %736 = vmatprep.subr.mxu0 0.0
        %737 = vmatpush1.msra.mxu0 0.0
        %738 = vmatprep.subr.mxu0 0.0
        %739 = vmatpush1.msra.mxu0 0.0
        %740 = vmatprep.subr.mxu0 0.0
        %741 = vmatpush1.msra.mxu0 0.0
        %742 = vmatprep.subr.mxu0 0.0
        %743 = vmatpush1.msra.mxu0 0.0
        %744 = vmatprep.subr.mxu0 0.0
        %745 = vmatpush1.msra.mxu0 0.0
        %746 = vmatprep.subr.mxu0 0.0
        %747 = vmatpush1.msra.mxu0 0.0
        %748 = vmatprep.subr.mxu0 0.0
        %749 = vmatpush1.msra.mxu0 0.0
        %750 = vmatprep.subr.mxu0 0.0
        %751 = vmatpush1.msra.mxu0 0.0
        %752 = vmatprep.subr.mxu0 0.0
        %753 = vmatpush1.msra.mxu0 0.0
        %754 = vmatprep.subr.mxu0 0.0
        %755 = vmatpush1.msra.mxu0 0.0
        %756 = vmatprep.subr.mxu0 0.0
        %757 = vmatpush1.msra.mxu0 0.0
        %758 = vmatprep.subr.mxu0 0.0
        %759 = vmatpush1.msra.mxu0 0.0
        %760 = vmatprep.subr.mxu0 0.0
        %761 = vmatpush1.msra.mxu0 0.0
        %762 = vmatprep.subr.mxu0 0.0
        %763 = vmatpush1.msra.mxu0 0.0
        %764 = vmatprep.subr.mxu0 0.0
        %765 = vmatpush1.msra.mxu0 0.0
        %766 = vmatprep.subr.mxu0 0.0
        %767 = vmatpush1.msra.mxu0 0.0
        %768 = vmatprep.subr.mxu0 0.0
        %769 = vmatpush1.msra.mxu0 0.0
        %770 = vmatprep.subr.mxu0 0.0
        %771 = vmatpush1.msra.mxu0 0.0
        %772 = vmatprep.subr.mxu0 0.0
        %773 = vmatpush1.msra.mxu0 0.0
        %774 = vmatprep.subr.mxu0 0.0
        %775 = vmatpush1.msra.mxu0 0.0
        %776 = vmatprep.subr.mxu0 0.0
        %777 = vmatpush1.msra.mxu0 0.0
        %778 = vmatprep.subr.mxu0 0.0
        %779 = vmatpush1.msra.mxu0 0.0
        %780 = vmatprep.subr.mxu0 0.0
        %781 = vmatpush1.msra.mxu0 0.0
        %782 = vmatprep.subr.mxu0 0.0
        %783 = vmatpush1.msra.mxu0 0.0
        %784 = vmatprep.subr.mxu0 0.0
        %785 = vmatpush1.msra.mxu0 0.0
        %786 = vmatprep.subr.mxu0 0.0
        %787 = vmatpush1.msra.mxu0 0.0
        %788 = vmatprep.mubr.f32.mxu0 0.0
        %789 = vmatmul.mubr.f32.gmra.mrb[0].mxu0 %v722
        %v790 = vpop.f32.mrb[0].mxu0
        %v791 = vadd.f32 0.0, %v790
        %v792 = vpop.f32.mrb[0].mxu0
        %793 = vdwg.mxu0
        %vm794 = vcmask 253952
        %795 = vst.msk [vmem:[#allocation2] sm:$0x1] %vm794, %v791
        %797 = vrot.lane.b32.xlu0 %v791, 32
        %v798 = vpop.permute.xlu0 %797
        %vm800 = vcmask 517377
        %801 = vst.msk [vmem:[#allocation2 - $0x1] sm:$0x2] %vm800, %v798
        %802 = vrot.lane.b32.xlu0 %v791, 64
        %v803 = vpop.permute.xlu0 %802
        %vm805 = vcmask 780802
        %806 = vst.msk [vmem:[#allocation2 - $0x2] sm:$0x4] %vm805, %v803
        %807 = vrot.lane.b32.xlu0 %v791, 96
        %v808 = vpop.permute.xlu0 %807
        %vm810 = vcmask 1044227
        %811 = vst.msk [vmem:[#allocation2 - $0x3] sm:$0x8] %vm810, %v808
        %v812 = vld [vmem:[#allocation2] sm:$0x1]
        %v813 = vld [vmem:[%s8] sm:$0xff]
        %v814 = vld [vmem:[%s8 + $0x8] sm:$0xff]
        %v815 = vld [vmem:[%s8 + $0x10] sm:$0xff]
        %v816 = vld [vmem:[%s8 + $0x18] sm:$0xff]
        %v817 = vld [vmem:[%s8 + $0x20] sm:$0xff]
        %v818 = vld [vmem:[%s8 + $0x28] sm:$0xff]
        %v819 = vld [vmem:[%s8 + $0x30] sm:$0xff]
        %v820 = vld [vmem:[%s8 + $0x38] sm:$0xff]
        %v821 = vld [vmem:[%s8 + $0x40] sm:$0xff]
        %v822 = vld [vmem:[%s8 + $0x48] sm:$0xff]
        %v823 = vld [vmem:[%s8 + $0x50] sm:$0xff]
        %v824 = vld [vmem:[%s8 + $0x58] sm:$0xff]
        %v825 = vld [vmem:[%s8 + $0x60] sm:$0xff]
        %v826 = vld [vmem:[%s8 + $0x68] sm:$0xff]
        %v827 = vld [vmem:[%s8 + $0x70] sm:$0xff]
        %v828 = vld [vmem:[%s8 + $0x78] sm:$0xff]
        %v829 = vld [vmem:[%s9] sm:$0x1]
        %830 = vmatprep.subr.mxu0 0.0
        %831 = vmatpush1.msra.mxu0 %v813
        %832 = vmatprep.subr.mxu0 0.0
        %833 = vmatpush1.msra.mxu0 %v814
        %834 = vmatprep.subr.mxu0 0.0
        %835 = vmatpush1.msra.mxu0 %v815
        %836 = vmatprep.subr.mxu0 0.0
        %837 = vmatpush1.msra.mxu0 %v816
        %838 = vmatprep.subr.mxu0 0.0
        %839 = vmatpush1.msra.mxu0 %v817
        %840 = vmatprep.subr.mxu0 0.0
        %841 = vmatpush1.msra.mxu0 %v818
        %842 = vmatprep.subr.mxu0 0.0
        %843 = vmatpush1.msra.mxu0 %v819
        %844 = vmatprep.subr.mxu0 0.0
        %845 = vmatpush1.msra.mxu0 %v820
        %846 = vmatprep.subr.mxu0 0.0
        %847 = vmatpush1.msra.mxu0 %v821
        %848 = vmatprep.subr.mxu0 0.0
        %849 = vmatpush1.msra.mxu0 %v822
        %850 = vmatprep.subr.mxu0 0.0
        %851 = vmatpush1.msra.mxu0 %v823
        %852 = vmatprep.subr.mxu0 0.0
        %853 = vmatpush1.msra.mxu0 %v824
        %854 = vmatprep.subr.mxu0 0.0
        %855 = vmatpush1.msra.mxu0 %v825
        %856 = vmatprep.subr.mxu0 0.0
        %857 = vmatpush1.msra.mxu0 %v826
        %858 = vmatprep.subr.mxu0 0.0
        %859 = vmatpush1.msra.mxu0 %v827
        %860 = vmatprep.subr.mxu0 0.0
        %861 = vmatpush1.msra.mxu0 %v828
        %862 = vmatprep.subr.mxu0 0.0
        %863 = vmatpush1.msra.mxu0 0.0
        %864 = vmatprep.subr.mxu0 0.0
        %865 = vmatpush1.msra.mxu0 0.0
        %866 = vmatprep.subr.mxu0 0.0
        %867 = vmatpush1.msra.mxu0 0.0
        %868 = vmatprep.subr.mxu0 0.0
        %869 = vmatpush1.msra.mxu0 0.0
        %870 = vmatprep.subr.mxu0 0.0
        %871 = vmatpush1.msra.mxu0 0.0
        %872 = vmatprep.subr.mxu0 0.0
        %873 = vmatpush1.msra.mxu0 0.0
        %874 = vmatprep.subr.mxu0 0.0
        %875 = vmatpush1.msra.mxu0 0.0
        %876 = vmatprep.subr.mxu0 0.0
        %877 = vmatpush1.msra.mxu0 0.0
        %878 = vmatprep.subr.mxu0 0.0
        %879 = vmatpush1.msra.mxu0 0.0
        %880 = vmatprep.subr.mxu0 0.0
        %881 = vmatpush1.msra.mxu0 0.0
        %882 = vmatprep.subr.mxu0 0.0
        %883 = vmatpush1.msra.mxu0 0.0
        %884 = vmatprep.subr.mxu0 0.0
        %885 = vmatpush1.msra.mxu0 0.0
        %886 = vmatprep.subr.mxu0 0.0
        %887 = vmatpush1.msra.mxu0 0.0
        %888 = vmatprep.subr.mxu0 0.0
        %889 = vmatpush1.msra.mxu0 0.0
        %890 = vmatprep.subr.mxu0 0.0
        %891 = vmatpush1.msra.mxu0 0.0
        %892 = vmatprep.subr.mxu0 0.0
        %893 = vmatpush1.msra.mxu0 0.0
        %894 = vmatprep.mubr.f32.mxu0 0.0
        %895 = vmatmul.mubr.f32.gmra.mrb[0].mxu0 %v812
        %v896 = vpop.f32.mrb[0].mxu0
        %v897 = vadd.f32 %v829, %v896
        %v898 = vpop.f32.mrb[0].mxu0
        %899 = vdwg.mxu0
        %900 = vst.msk [vmem:[%s417] sm:$0x1] %vm794, %v897
        %s901 = sand.u32 %s267, 1
        %s902 = scalar_lea.sflag [#allocation4], %s901
        %s903 = sand.u32 %s267, 1
        %s904 = scalar_lea.vmem [#allocation3], %s903
        %s905 = sand.u32 %s293, 1
        %s906 = scalar_lea.sflag [#allocation6], %s905
        %s907 = sand.u32 %s293, 1
        %s908 = scalar_lea.vmem [#allocation5], %s907
        // Predicated region
        $region61: #{tpu_custom_call.1} parent=59 // pred_check
          %p909 = pneg %p277
        $region62: #{tpu_custom_call.1} parent=59 // pred_check_branch
          %911 = sbr.rel (%p909) target = $region64
        $region63: #{tpu_custom_call.1} parent=59 // pred_region
          %s913 = ssub.s32 16, 16
          %914 = vsyncadd %s902, %s913
          %s915 = smul.addr %s29, 16
          %s916 = scalar_lea.hbm %s10, %s915
          %s918 = sshll.u32 %s904, 4
          %s919 = int_to_ptr.vmem [resolvable:$true] %s918
          %921 = dma.vmem_to_hbm [thread:$0]  %s919, 16, %s916, %s902
        $region64: #{tpu_custom_call.1} parent=59 // pred_fallthru
          _
        // Predicated region
        $region65: #{tpu_custom_call.1} parent=59 // pred_check
          %p922 = pneg %p303
        $region66: #{tpu_custom_call.1} parent=59 // pred_check_branch
          %924 = sbr.rel (%p922) target = $region68
        $region67: #{tpu_custom_call.1} parent=59 // pred_region
          %s926 = ssub.s32 16, 16
          %927 = vsyncadd %s906, %s926
          %s928 = smul.addr %s29, 16
          %s929 = scalar_lea.hbm %s11, %s928
          %s931 = sshll.u32 %s908, 4
          %s932 = int_to_ptr.vmem [resolvable:$true] %s931
          %934 = dma.vmem_to_hbm [thread:$0]  %s932, 16, %s929, %s906
        $region68: #{tpu_custom_call.1} parent=59 // pred_fallthru
          _
      $region60: #{tpu_custom_call.1} parent=5 // pred_fallthru
        _
      %p935 = scmp.le.s32.totalorder 2, %s24
      // Predicated region
      $region69: #{tpu_custom_call.1} parent=5 // pred_check
        %p936 = pneg %p935
      $region70: #{tpu_custom_call.1} parent=5 // pred_check_branch
        %938 = sbr.rel (%p936) target = $region72
      $region71: #{tpu_custom_call.1} parent=5 // pred_region
        %s939 = ssub.s32 %s24, 2
        // Predicated region
        $region73: #{tpu_custom_call.1} parent=71 // pred_check
          %p940 = pneg %p283
        $region74: #{tpu_custom_call.1} parent=71 // pred_check_branch
          %942 = sbr.rel (%p940) target = $region76
        $region75: #{tpu_custom_call.1} parent=71 // pred_region
          %s943 = sand.u32 %s268, 1
          %s944 = scalar_lea.sflag [#allocation4], %s943
          %s945 = sand.u32 %s268, 1
          %s946 = scalar_lea.vmem [#allocation3], %s945
          %947 = dma.done %s944, 16
        $region76: #{tpu_custom_call.1} parent=71 // pred_fallthru
          _
        // Predicated region
        $region77: #{tpu_custom_call.1} parent=71 // pred_check
          %p948 = pneg %p309
        $region78: #{tpu_custom_call.1} parent=71 // pred_check_branch
          %950 = sbr.rel (%p948) target = $region80
        $region79: #{tpu_custom_call.1} parent=71 // pred_region
          %s951 = sand.u32 %s294, 1
          %s952 = scalar_lea.sflag [#allocation6], %s951
          %s953 = sand.u32 %s294, 1
          %s954 = scalar_lea.vmem [#allocation5], %s953
          %955 = dma.done %s952, 16
        $region80: #{tpu_custom_call.1} parent=71 // pred_fallthru
          _
      $region72: #{tpu_custom_call.1} parent=5 // pred_fallthru
        _
    $region6: #{tpu_custom_call.1} parent=1 // loop_footer
      %s28 = sadd.s32 1, %s24
    $region7: #{tpu_custom_call.1} parent=1 // loop_footer_branch
      %23 = sbr.rel target = $region3
    $region8: #{tpu_custom_call.1} parent=1 // loop_exit
      _
    %956 = vsyncpa [#allocation4], 1
    %s957 = scalar_lea.sflag [#allocation4], 1
    %958 = vsyncpa %s957, 1
    %959 = vsyncpa [#allocation6], 1
    %s960 = scalar_lea.sflag [#allocation6], 1
    %961 = vsyncpa %s960, 1

</llo_original>
